<compile_context>
chip_gen: v6e
topology: v6e:2x2x1
jax: 0.10.0
libtpu: 0.0.40
codegen_flags: <defaults>
</compile_context>

<pallas_src>
import functools

import jax
import jax.numpy as jnp
from jax.experimental import pallas as pl
from jax.experimental.pallas import tpu as pltpu


def _crossnet_kernel(x_ref, ker_ref, bias_ref, wlin_ref, blin_ref, o_ref, *,
                     layer_num):
    # x_ref:    (F, bm)   feature-major batch block of x_0 (batch on lanes)
    # ker_ref:  (F, L)    stacked cross kernels (each originally (F, 1))
    # bias_ref: (F, L)    stacked cross biases  (each originally (F, 1))
    # wlin_ref: (F, 1)    final linear weight
    # blin_ref: (1,)      final linear bias (SMEM scalar)
    # o_ref:    (1, bm)   output logits, batch on lanes (lane-dense store)
    x0 = x_ref[...].astype(jnp.float32)            # (F, bm)
    kers = ker_ref[...].astype(jnp.float32)        # (F, L), loaded once
    biases = bias_ref[...].astype(jnp.float32)     # (F, L), loaded once
    wlin = wlin_ref[...].astype(jnp.float32)       # (F, 1)

    x_l = x0
    # Static Python loop over cross layers (layer_num is small & static).
    for i in range(layer_num):
        k_i = kers[:, i:i + 1]                     # (F, 1) static slice
        b_i = biases[:, i:i + 1]                   # (F, 1)
        # xl_w[b] = <x_l[:, b], kernel_i>  ->  (1, bm) sublane reduce (XLU)
        xl_w = jnp.sum(x_l * k_i, axis=0, keepdims=True)
        # (F,bm)*(1,bm) + (F,1) + (F,bm): all cheap sublane/lane broadcasts
        z = x0 * xl_w + b_i + x_l
        # sigmoid(z) == 0.5*tanh(0.5*z) + 0.5 : single EUP op, overflow-safe
        x_l = 0.5 * jnp.tanh(0.5 * z) + 0.5

    # Final Linear(in_features -> 1), fused. Output stays lane-dense (1, bm).
    out = jnp.sum(x_l * wlin, axis=0, keepdims=True) + blin_ref[0]
    o_ref[...] = out.astype(o_ref.dtype)


def crossnet_forward(x, cross_kernels, cross_biases, lin_w, lin_b, *,
                     block_b=None):
    """CrossNet forward. x: (B, F, 1) or (B, F). Returns (B, 1) float32."""
    x2 = x[..., 0] if x.ndim == 3 else x           # (B, F), native dtype
    B, F = x2.shape
    # Feature-major relayout: batch on the lane axis. (XLA usually fuses this
    # transpose into x's producer; the kernel itself then runs lane-dense.)
    xt = x2.T                                      # (F, B), native dtype

    L = cross_kernels.shape[0]
    kers = cross_kernels.reshape(L, F).T.astype(jnp.float32)    # (F, L)
    biases = cross_biases.reshape(L, F).T.astype(jnp.float32)   # (F, L)
    wlin = lin_w.reshape(1, F).T.astype(jnp.float32)            # (F, 1)
    blin = lin_b.reshape(1).astype(jnp.float32)                 # (1,) -> SMEM

    # Batch tiling (lane axis): one fat block for small B; otherwise lane-dense
    # multiples of 128, capped at 1024 and sized so >= 2 blocks exist (both
    # v7x TensorCores engage). No jnp.pad: ragged tail lanes are independent
    # columns; Pallas masks their writeback.
    if block_b is None:
        if B <= 512:
            block_b = B
        else:
            block_b = min(1024, 128 * pl.cdiv(B, 2 * 128))
    n_blocks = pl.cdiv(B, block_b)

    kernel = functools.partial(_crossnet_kernel, layer_num=L)

    out = pl.pallas_call(
        kernel,
        out_shape=jax.ShapeDtypeStruct((1, B), jnp.float32),
        grid_spec=pltpu.PrefetchScalarGridSpec(
            num_scalar_prefetch=0,
            grid=(n_blocks,),
            in_specs=[
                pl.BlockSpec((F, block_b), lambda i: (0, i)),
                pl.BlockSpec((F, L), lambda i: (0, 0)),
                pl.BlockSpec((F, L), lambda i: (0, 0)),
                pl.BlockSpec((F, 1), lambda i: (0, 0)),
                pl.BlockSpec(memory_space=pltpu.MemorySpace.SMEM),
            ],
            out_specs=pl.BlockSpec((1, block_b), lambda i: (0, i)),
        ),
        compiler_params=pltpu.CompilerParams(
            dimension_semantics=("parallel",)),
    )(xt, kers, biases, wlin, blin)

    return out[0][:, None]                         # (B, 1)


if __name__ == "__main__":
    key = jax.random.PRNGKey(0)
    k_x, k_k, k_b, k_w, k_bl = jax.random.split(key, 5)

    # CrossNet(in_features=32, layer_num=3), batch=8, inputs (B, F, 1).
    B, F, L = 8, 32, 3
    x = jax.random.normal(k_x, (B, F, 1), dtype=jnp.float32)
    cross_kernels = jax.random.normal(k_k, (L, F, 1), dtype=jnp.float32) * 0.1
    cross_biases = jax.random.normal(k_b, (L, F, 1), dtype=jnp.float32) * 0.1
    lin_w = jax.random.normal(k_w, (1, F), dtype=jnp.float32) * 0.1
    lin_b = jax.random.normal(k_bl, (1,), dtype=jnp.float32) * 0.1

    out = crossnet_forward(x, cross_kernels, cross_biases, lin_w, lin_b)
    out = jax.block_until_ready(out)

    # Pure-JAX reference mirroring the PyTorch forward exactly.
    x0 = x.astype(jnp.float32)
    x_l = x0
    for i in range(L):
        xl_w = jnp.tensordot(x_l, cross_kernels[i], axes=([1], [0]))  # (B,1,1)
        dot_ = jnp.matmul(x0, xl_w)                                   # (B,F,1)
        x_l = dot_ + cross_biases[i] + x_l
        x_l = jax.nn.sigmoid(x_l)
    x_sq = jnp.squeeze(x_l, axis=2)                                   # (B, F)
    ref = x_sq @ lin_w.T + lin_b[None, :]                             # (B, 1)

    assert out.shape == (B, 1)
    assert jnp.allclose(out, ref, rtol=1e-4, atol=1e-4), (
        float(jnp.max(jnp.abs(out - ref))))
    print("KERNEL_OK")
</pallas_src>

<mosaic_0001>
module attributes {stable_mosaic.version = 11 : i64} {
  func.func @_crossnet_kernel(%arg0: i32, %arg1: memref<32x8xf32, #tpu.memory_space<vmem>>, %arg2: memref<32x3xf32, #tpu.memory_space<vmem>>, %arg3: memref<32x3xf32, #tpu.memory_space<vmem>>, %arg4: memref<32x1xf32, #tpu.memory_space<vmem>>, %arg5: memref<1xf32, #tpu.memory_space<smem>>, %arg6: memref<1x8xf32, #tpu.memory_space<vmem>>) attributes {dimension_semantics = [#tpu.dimension_semantics<parallel>], iteration_bounds = array<i64: 1>, scalar_prefetch = 0 : i64, scratch_operands = 0 : i64, tpu.core_type = #tpu.core_type<tc>, window_params = [{transform_indices = @transform_0, window_bounds = array<i64: 32, 8>}, {pipeline_mode = #tpu.pipeline_mode<synchronous>, transform_indices = @transform_1, window_bounds = array<i64: 32, 3>}, {pipeline_mode = #tpu.pipeline_mode<synchronous>, transform_indices = @transform_2, window_bounds = array<i64: 32, 3>}, {pipeline_mode = #tpu.pipeline_mode<synchronous>, transform_indices = @transform_3, window_bounds = array<i64: 32, 1>}, {transform_indices = @transform_4, window_bounds = array<i64: 1>}, {transform_indices = @transform_5, window_bounds = array<i64: 1, 8>}]} {
    %c0 = arith.constant 0 : index
    %c0_0 = arith.constant 0 : index
    %0 = vector.load %arg1[%c0, %c0_0] : memref<32x8xf32, #tpu.memory_space<vmem>>, vector<32x8xf32>
    %c0_1 = arith.constant 0 : index
    %c0_2 = arith.constant 0 : index
    %1 = vector.load %arg2[%c0_1, %c0_2] : memref<32x3xf32, #tpu.memory_space<vmem>>, vector<32x3xf32>
    %c0_3 = arith.constant 0 : index
    %c0_4 = arith.constant 0 : index
    %2 = vector.load %arg3[%c0_3, %c0_4] : memref<32x3xf32, #tpu.memory_space<vmem>>, vector<32x3xf32>
    %c0_5 = arith.constant 0 : index
    %c0_6 = arith.constant 0 : index
    %3 = vector.load %arg4[%c0_5, %c0_6] : memref<32x1xf32, #tpu.memory_space<vmem>>, vector<32x1xf32>
    %4 = vector.extract_strided_slice %1 {offsets = [0, 0], sizes = [32, 1], strides = [1, 1]} : vector<32x3xf32> to vector<32x1xf32>
    %5 = vector.extract_strided_slice %2 {offsets = [0, 0], sizes = [32, 1], strides = [1, 1]} : vector<32x3xf32> to vector<32x1xf32>
    %6 = vector.broadcast %4 : vector<32x1xf32> to vector<32x8xf32>
    %7 = arith.mulf %0, %6 : vector<32x8xf32>
    %cst = arith.constant dense<0.000000e+00> : vector<8xf32>
    %8 = vector.multi_reduction <add>, %7, %cst [0] : vector<32x8xf32> to vector<8xf32>
    %9 = vector.shape_cast %8 : vector<8xf32> to vector<1x8xf32>
    %10 = vector.broadcast %9 : vector<1x8xf32> to vector<32x8xf32>
    %11 = arith.mulf %0, %10 : vector<32x8xf32>
    %12 = vector.broadcast %5 : vector<32x1xf32> to vector<32x8xf32>
    %13 = arith.addf %11, %12 : vector<32x8xf32>
    %14 = arith.addf %13, %0 : vector<32x8xf32>
    %cst_7 = arith.constant 5.000000e-01 : f32
    %15 = vector.broadcast %cst_7 : f32 to vector<32x8xf32>
    %16 = arith.mulf %15, %14 : vector<32x8xf32>
    %17 = math.tanh %16 : vector<32x8xf32>
    %cst_8 = arith.constant 5.000000e-01 : f32
    %18 = vector.broadcast %cst_8 : f32 to vector<32x8xf32>
    %19 = arith.mulf %18, %17 : vector<32x8xf32>
    %cst_9 = arith.constant 5.000000e-01 : f32
    %20 = vector.broadcast %cst_9 : f32 to vector<32x8xf32>
    %21 = arith.addf %19, %20 : vector<32x8xf32>
    %22 = vector.extract_strided_slice %1 {offsets = [0, 1], sizes = [32, 1], strides = [1, 1]} : vector<32x3xf32> to vector<32x1xf32>
    %23 = vector.extract_strided_slice %2 {offsets = [0, 1], sizes = [32, 1], strides = [1, 1]} : vector<32x3xf32> to vector<32x1xf32>
    %24 = vector.broadcast %22 : vector<32x1xf32> to vector<32x8xf32>
    %25 = arith.mulf %21, %24 : vector<32x8xf32>
    %cst_10 = arith.constant dense<0.000000e+00> : vector<8xf32>
    %26 = vector.multi_reduction <add>, %25, %cst_10 [0] : vector<32x8xf32> to vector<8xf32>
    %27 = vector.shape_cast %26 : vector<8xf32> to vector<1x8xf32>
    %28 = vector.broadcast %27 : vector<1x8xf32> to vector<32x8xf32>
    %29 = arith.mulf %0, %28 : vector<32x8xf32>
    %30 = vector.broadcast %23 : vector<32x1xf32> to vector<32x8xf32>
    %31 = arith.addf %29, %30 : vector<32x8xf32>
    %32 = arith.addf %31, %21 : vector<32x8xf32>
    %cst_11 = arith.constant 5.000000e-01 : f32
    %33 = vector.broadcast %cst_11 : f32 to vector<32x8xf32>
    %34 = arith.mulf %33, %32 : vector<32x8xf32>
    %35 = math.tanh %34 : vector<32x8xf32>
    %cst_12 = arith.constant 5.000000e-01 : f32
    %36 = vector.broadcast %cst_12 : f32 to vector<32x8xf32>
    %37 = arith.mulf %36, %35 : vector<32x8xf32>
    %cst_13 = arith.constant 5.000000e-01 : f32
    %38 = vector.broadcast %cst_13 : f32 to vector<32x8xf32>
    %39 = arith.addf %37, %38 : vector<32x8xf32>
    %40 = vector.extract_strided_slice %1 {offsets = [0, 2], sizes = [32, 1], strides = [1, 1]} : vector<32x3xf32> to vector<32x1xf32>
    %41 = vector.extract_strided_slice %2 {offsets = [0, 2], sizes = [32, 1], strides = [1, 1]} : vector<32x3xf32> to vector<32x1xf32>
    %42 = vector.broadcast %40 : vector<32x1xf32> to vector<32x8xf32>
    %43 = arith.mulf %39, %42 : vector<32x8xf32>
    %cst_14 = arith.constant dense<0.000000e+00> : vector<8xf32>
    %44 = vector.multi_reduction <add>, %43, %cst_14 [0] : vector<32x8xf32> to vector<8xf32>
    %45 = vector.shape_cast %44 : vector<8xf32> to vector<1x8xf32>
    %46 = vector.broadcast %45 : vector<1x8xf32> to vector<32x8xf32>
    %47 = arith.mulf %0, %46 : vector<32x8xf32>
    %48 = vector.broadcast %41 : vector<32x1xf32> to vector<32x8xf32>
    %49 = arith.addf %47, %48 : vector<32x8xf32>
    %50 = arith.addf %49, %39 : vector<32x8xf32>
    %cst_15 = arith.constant 5.000000e-01 : f32
    %51 = vector.broadcast %cst_15 : f32 to vector<32x8xf32>
    %52 = arith.mulf %51, %50 : vector<32x8xf32>
    %53 = math.tanh %52 : vector<32x8xf32>
    %cst_16 = arith.constant 5.000000e-01 : f32
    %54 = vector.broadcast %cst_16 : f32 to vector<32x8xf32>
    %55 = arith.mulf %54, %53 : vector<32x8xf32>
    %cst_17 = arith.constant 5.000000e-01 : f32
    %56 = vector.broadcast %cst_17 : f32 to vector<32x8xf32>
    %57 = arith.addf %55, %56 : vector<32x8xf32>
    %58 = vector.broadcast %3 : vector<32x1xf32> to vector<32x8xf32>
    %59 = arith.mulf %57, %58 : vector<32x8xf32>
    %cst_18 = arith.constant dense<0.000000e+00> : vector<8xf32>
    %60 = vector.multi_reduction <add>, %59, %cst_18 [0] : vector<32x8xf32> to vector<8xf32>
    %61 = vector.shape_cast %60 : vector<8xf32> to vector<1x8xf32>
    %c0_19 = arith.constant 0 : index
    %62 = memref.load %arg5[%c0_19] : memref<1xf32, #tpu.memory_space<smem>>
    %63 = vector.broadcast %62 : f32 to vector<1x8xf32>
    %64 = arith.addf %61, %63 : vector<1x8xf32>
    %c0_20 = arith.constant 0 : index
    %c0_21 = arith.constant 0 : index
    %65 = vector.load %arg6[%c0_20, %c0_21] : memref<1x8xf32, #tpu.memory_space<vmem>>, vector<1x8xf32>
    tpu.vector_store %arg6[%c0_20, %c0_21], %64 {strides = array<i32>} : memref<1x8xf32, #tpu.memory_space<vmem>>, vector<1x8xf32>,
    return
  }
  func.func @transform_0(%arg0: i32) -> (i32, i32) {
    %c0_i32 = arith.constant 0 : i32
    %c0_i32_0 = arith.constant 0 : i32
    return %c0_i32, %arg0 : i32, i32
  }
  func.func @transform_1(%arg0: i32) -> (i32, i32) {
    %c0_i32 = arith.constant 0 : i32
    %c0_i32_0 = arith.constant 0 : i32
    %c0_i32_1 = arith.constant 0 : i32
    return %c0_i32, %c0_i32_0 : i32, i32
  }
  func.func @transform_2(%arg0: i32) -> (i32, i32) {
    %c0_i32 = arith.constant 0 : i32
    %c0_i32_0 = arith.constant 0 : i32
    %c0_i32_1 = arith.constant 0 : i32
    return %c0_i32, %c0_i32_0 : i32, i32
  }
  func.func @transform_3(%arg0: i32) -> (i32, i32) {
    %c0_i32 = arith.constant 0 : i32
    %c0_i32_0 = arith.constant 0 : i32
    %c0_i32_1 = arith.constant 0 : i32
    return %c0_i32, %c0_i32_0 : i32, i32
  }
  func.func @transform_4(%arg0: i32) -> i32 {
    %c0_i32 = arith.constant 0 : i32
    %c0_i32_0 = arith.constant 0 : i32
    return %c0_i32 : i32
  }
  func.func @transform_5(%arg0: i32) -> (i32, i32) {
    %c0_i32 = arith.constant 0 : i32
    %c0_i32_0 = arith.constant 0 : i32
    return %c0_i32, %arg0 : i32, i32
  }
}

</mosaic_0001>

<llo_original>
// kernel: tpu_custom_call.1
$region0: #{tpu_custom_call.1}
  #allocation0 [shape = 'u32[]', space=smem, size = 0x4, offset = 0x4, fixed_abs, tag = 'smem constant byte address 0x4 - core index']
  #allocation1 [shape = 'u32[144,128]{1,0:T(1,128)}', space=vmem, size = 0x12000, scoped, tag = 'internal scratch']
  #allocation2 [shape = 'f32[1]{0:T(128)S(6)}', space=smem, size = 0x200, scoped, tag = 'scoped memory for tpu_custom_call.1']
  %s0 = inlined_call_operand.vmem [shape: f32[32,8], index: 0, kind: input, shape index: {}]
  %s1 = inlined_call_operand.vmem [shape: f32[32,3], index: 1, kind: input, shape index: {}]
  %s2 = inlined_call_operand.vmem [shape: f32[32,3], index: 2, kind: input, shape index: {}]
  %s3 = inlined_call_operand.vmem [shape: f32[32,1], index: 3, kind: input, shape index: {}]
  %s4 = inlined_call_operand.<no memory space> [shape: f32[1], index: 4, kind: input, shape index: {}]
  %s5 = inlined_call_operand.hbm [shape: f32[1,8], index: 5, kind: output, shape index: {}]
  %s6 = sld [smem:[#allocation0]]
  $region30: #{tpu_custom_call.1} parent=0
    _
  %s8 = ssub.s32 1, %s6
  %s9 = scalar_select 0, %s8, %s6
  %10 = sst [smem:[#allocation2]] %s4
  $region1: #{tpu_custom_call.1} parent=0
    #allocation3 [shape = 'u8[512]{0}', space=vmem, size = 0x400, scoped, tag = 'output window, operand 0, single buffered']
    #allocation4 [shape = 's32[1]{0}', space=sflag, size = 0x4, scoped, tag = 'scoped memory for tpu_custom_call.1']
    %11 = vsyncpa [#allocation4], 0
    // Predicated region
    $region2: #{tpu_custom_call.1} parent=1 // pred_check
      _
    $region3: #{tpu_custom_call.1} parent=1 // pred_check_branch
      %13 = sbr.rel (0) target = $region5
    $region4: #{tpu_custom_call.1} parent=1 // pred_region
      _
    $region5: #{tpu_custom_call.1} parent=1 // pred_fallthru
      _
    // Predicated region
    $region6: #{tpu_custom_call.1} parent=1 // pred_check
      _
    $region7: #{tpu_custom_call.1} parent=1 // pred_check_branch
      %15 = sbr.rel (0) target = $region9
    $region8: #{tpu_custom_call.1} parent=1 // pred_region
      _
    $region9: #{tpu_custom_call.1} parent=1 // pred_fallthru
      _
    // Predicated region
    $region10: #{tpu_custom_call.1} parent=1 // pred_check
      _
    $region11: #{tpu_custom_call.1} parent=1 // pred_check_branch
      %17 = sbr.rel (0) target = $region13
    $region12: #{tpu_custom_call.1} parent=1 // pred_region
      _
    $region13: #{tpu_custom_call.1} parent=1 // pred_fallthru
      _
    // Predicated region
    $region14: #{tpu_custom_call.1} parent=1 // pred_check
      _
    $region15: #{tpu_custom_call.1} parent=1 // pred_check_branch
      %19 = sbr.rel (0) target = $region17
    $region16: #{tpu_custom_call.1} parent=1 // pred_region
      _
    $region17: #{tpu_custom_call.1} parent=1 // pred_fallthru
      _
    // Predicated region
    $region18: #{tpu_custom_call.1} parent=1 // pred_check
      _
    $region19: #{tpu_custom_call.1} parent=1 // pred_check_branch
      %21 = sbr.rel (0) target = $region21
    $region20: #{tpu_custom_call.1} parent=1 // pred_region
      _
    $region21: #{tpu_custom_call.1} parent=1 // pred_fallthru
      _
    %v22 = vld [vmem:[%s0] sm:$0xff]
    %v23 = vld [vmem:[%s0 + $0x8] sm:$0xff]
    %v24 = vld [vmem:[%s0 + $0x10] sm:$0xff]
    %v25 = vld [vmem:[%s0 + $0x18] sm:$0xff]
    %v26 = vld [vmem:[%s1] sm:$0xff]
    %v27 = vld [vmem:[%s1 + $0x8] sm:$0xff]
    %v28 = vld [vmem:[%s1 + $0x10] sm:$0xff]
    %v29 = vld [vmem:[%s1 + $0x18] sm:$0xff]
    %v30 = vld [vmem:[%s2] sm:$0xff]
    %v31 = vld [vmem:[%s2 + $0x8] sm:$0xff]
    %v32 = vld [vmem:[%s2 + $0x10] sm:$0xff]
    %v33 = vld [vmem:[%s2 + $0x18] sm:$0xff]
    %v34 = vld [vmem:[%s3] sm:$0xff]
    %v35 = vld [vmem:[%s3 + $0x8] sm:$0xff]
    %v36 = vld [vmem:[%s3 + $0x10] sm:$0xff]
    %v37 = vld [vmem:[%s3 + $0x18] sm:$0xff]
    %39 = vset.pattern.permute.xlu0 0
    %40 = vperm.xlu0 %39, %v26
    %v41 = vpop.permute.xlu0 %40
    %44 = vset.pattern.permute.xlu0 0
    %45 = vperm.xlu0 %44, %v27
    %v46 = vpop.permute.xlu0 %45
    %49 = vset.pattern.permute.xlu0 0
    %50 = vperm.xlu0 %49, %v28
    %v51 = vpop.permute.xlu0 %50
    %54 = vset.pattern.permute.xlu0 0
    %55 = vperm.xlu0 %54, %v29
    %v56 = vpop.permute.xlu0 %55
    %v58 = vmul.f32 %v22, %v41
    %v59 = vmul.f32 %v23, %v46
    %v60 = vmul.f32 %v24, %v51
    %v61 = vmul.f32 %v25, %v56
    %vm62 = vcmask 64512
    %v63 = vsel %vm62, %v58, 0.0
    %v64 = vsel %vm62, %v59, 0.0
    %v65 = vadd.f32 %v63, %v64
    %v66 = vsel %vm62, %v60, 0.0
    %v67 = vadd.f32 %v65, %v66
    %v68 = vsel %vm62, %v61, 0.0
    %v69 = vadd.f32 %v67, %v68
    %v70 = vrot.slane %v69, 4
    %v71 = vadd.f32 %v69, %v70
    %v72 = vrot.slane %v71, 2
    %v73 = vadd.f32 %v71, %v72
    %v74 = vrot.slane %v73, 1
    %v75 = vadd.f32 %v73, %v74
    %v76 = vmul.f32 %v22, %v75
    %v77 = vmul.f32 %v23, %v75
    %v78 = vmul.f32 %v24, %v75
    %v79 = vmul.f32 %v25, %v75
    %81 = vset.pattern.permute.xlu0 0
    %82 = vperm.xlu0 %81, %v30
    %v83 = vpop.permute.xlu0 %82
    %86 = vset.pattern.permute.xlu0 0
    %87 = vperm.xlu0 %86, %v31
    %v88 = vpop.permute.xlu0 %87
    %91 = vset.pattern.permute.xlu0 0
    %92 = vperm.xlu0 %91, %v32
    %v93 = vpop.permute.xlu0 %92
    %96 = vset.pattern.permute.xlu0 0
    %97 = vperm.xlu0 %96, %v33
    %v98 = vpop.permute.xlu0 %97
    %v100 = vadd.f32 %v76, %v83
    %v101 = vadd.f32 %v77, %v88
    %v102 = vadd.f32 %v78, %v93
    %v103 = vadd.f32 %v79, %v98
    %v104 = vadd.f32 %v100, %v22
    %v105 = vadd.f32 %v101, %v23
    %v106 = vadd.f32 %v102, %v24
    %v107 = vadd.f32 %v103, %v25
    %v108 = vmul.f32 %v104, 0.5
    %v109 = vmul.f32 %v105, 0.5
    %v110 = vmul.f32 %v106, 0.5
    %v111 = vmul.f32 %v107, 0.5
    %v112 = vtanh.pop %v108
    %v113 = vtanh.pop %v109
    %v114 = vtanh.pop %v110
    %v115 = vtanh.pop %v111
    %v116 = vmul.f32 %v112, 0.5
    %v117 = vmul.f32 %v113, 0.5
    %v118 = vmul.f32 %v114, 0.5
    %v119 = vmul.f32 %v115, 0.5
    %v120 = vadd.f32 %v116, 0.5
    %v121 = vadd.f32 %v117, 0.5
    %v122 = vadd.f32 %v118, 0.5
    %v123 = vadd.f32 %v119, 0.5
    %124 = vset.pattern.permute.xlu0 1
    %125 = vperm.xlu0 %124, %v26
    %v126 = vpop.permute.xlu0 %125
    %128 = vset.pattern.permute.xlu0 1
    %129 = vperm.xlu0 %128, %v27
    %v130 = vpop.permute.xlu0 %129
    %132 = vset.pattern.permute.xlu0 1
    %133 = vperm.xlu0 %132, %v28
    %v134 = vpop.permute.xlu0 %133
    %136 = vset.pattern.permute.xlu0 1
    %137 = vperm.xlu0 %136, %v29
    %v138 = vpop.permute.xlu0 %137
    %v140 = vmul.f32 %v120, %v126
    %v141 = vmul.f32 %v121, %v130
    %v142 = vmul.f32 %v122, %v134
    %v143 = vmul.f32 %v123, %v138
    %v144 = vsel %vm62, %v140, 0.0
    %v145 = vsel %vm62, %v141, 0.0
    %v146 = vadd.f32 %v144, %v145
    %v147 = vsel %vm62, %v142, 0.0
    %v148 = vadd.f32 %v146, %v147
    %v149 = vsel %vm62, %v143, 0.0
    %v150 = vadd.f32 %v148, %v149
    %v151 = vrot.slane %v150, 4
    %v152 = vadd.f32 %v150, %v151
    %v153 = vrot.slane %v152, 2
    %v154 = vadd.f32 %v152, %v153
    %v155 = vrot.slane %v154, 1
    %v156 = vadd.f32 %v154, %v155
    %v157 = vmul.f32 %v22, %v156
    %v158 = vmul.f32 %v23, %v156
    %v159 = vmul.f32 %v24, %v156
    %v160 = vmul.f32 %v25, %v156
    %161 = vset.pattern.permute.xlu0 1
    %162 = vperm.xlu0 %161, %v30
    %v163 = vpop.permute.xlu0 %162
    %165 = vset.pattern.permute.xlu0 1
    %166 = vperm.xlu0 %165, %v31
    %v167 = vpop.permute.xlu0 %166
    %169 = vset.pattern.permute.xlu0 1
    %170 = vperm.xlu0 %169, %v32
    %v171 = vpop.permute.xlu0 %170
    %173 = vset.pattern.permute.xlu0 1
    %174 = vperm.xlu0 %173, %v33
    %v175 = vpop.permute.xlu0 %174
    %v177 = vadd.f32 %v157, %v163
    %v178 = vadd.f32 %v158, %v167
    %v179 = vadd.f32 %v159, %v171
    %v180 = vadd.f32 %v160, %v175
    %v181 = vadd.f32 %v177, %v120
    %v182 = vadd.f32 %v178, %v121
    %v183 = vadd.f32 %v179, %v122
    %v184 = vadd.f32 %v180, %v123
    %v185 = vmul.f32 %v181, 0.5
    %v186 = vmul.f32 %v182, 0.5
    %v187 = vmul.f32 %v183, 0.5
    %v188 = vmul.f32 %v184, 0.5
    %v189 = vtanh.pop %v185
    %v190 = vtanh.pop %v186
    %v191 = vtanh.pop %v187
    %v192 = vtanh.pop %v188
    %v193 = vmul.f32 %v189, 0.5
    %v194 = vmul.f32 %v190, 0.5
    %v195 = vmul.f32 %v191, 0.5
    %v196 = vmul.f32 %v192, 0.5
    %v197 = vadd.f32 %v193, 0.5
    %v198 = vadd.f32 %v194, 0.5
    %v199 = vadd.f32 %v195, 0.5
    %v200 = vadd.f32 %v196, 0.5
    %201 = vset.pattern.permute.xlu0 2
    %202 = vperm.xlu0 %201, %v26
    %v203 = vpop.permute.xlu0 %202
    %205 = vset.pattern.permute.xlu0 2
    %206 = vperm.xlu0 %205, %v27
    %v207 = vpop.permute.xlu0 %206
    %209 = vset.pattern.permute.xlu0 2
    %210 = vperm.xlu0 %209, %v28
    %v211 = vpop.permute.xlu0 %210
    %213 = vset.pattern.permute.xlu0 2
    %214 = vperm.xlu0 %213, %v29
    %v215 = vpop.permute.xlu0 %214
    %v217 = vmul.f32 %v197, %v203
    %v218 = vmul.f32 %v198, %v207
    %v219 = vmul.f32 %v199, %v211
    %v220 = vmul.f32 %v200, %v215
    %v221 = vsel %vm62, %v217, 0.0
    %v222 = vsel %vm62, %v218, 0.0
    %v223 = vadd.f32 %v221, %v222
    %v224 = vsel %vm62, %v219, 0.0
    %v225 = vadd.f32 %v223, %v224
    %v226 = vsel %vm62, %v220, 0.0
    %v227 = vadd.f32 %v225, %v226
    %v228 = vrot.slane %v227, 4
    %v229 = vadd.f32 %v227, %v228
    %v230 = vrot.slane %v229, 2
    %v231 = vadd.f32 %v229, %v230
    %v232 = vrot.slane %v231, 1
    %v233 = vadd.f32 %v231, %v232
    %v234 = vmul.f32 %v22, %v233
    %v235 = vmul.f32 %v23, %v233
    %v236 = vmul.f32 %v24, %v233
    %v237 = vmul.f32 %v25, %v233
    %238 = vset.pattern.permute.xlu0 2
    %239 = vperm.xlu0 %238, %v30
    %v240 = vpop.permute.xlu0 %239
    %242 = vset.pattern.permute.xlu0 2
    %243 = vperm.xlu0 %242, %v31
    %v244 = vpop.permute.xlu0 %243
    %246 = vset.pattern.permute.xlu0 2
    %247 = vperm.xlu0 %246, %v32
    %v248 = vpop.permute.xlu0 %247
    %250 = vset.pattern.permute.xlu0 2
    %251 = vperm.xlu0 %250, %v33
    %v252 = vpop.permute.xlu0 %251
    %v254 = vadd.f32 %v234, %v240
    %v255 = vadd.f32 %v235, %v244
    %v256 = vadd.f32 %v236, %v248
    %v257 = vadd.f32 %v237, %v252
    %v258 = vadd.f32 %v254, %v197
    %v259 = vadd.f32 %v255, %v198
    %v260 = vadd.f32 %v256, %v199
    %v261 = vadd.f32 %v257, %v200
    %v262 = vmul.f32 %v258, 0.5
    %v263 = vmul.f32 %v259, 0.5
    %v264 = vmul.f32 %v260, 0.5
    %v265 = vmul.f32 %v261, 0.5
    %v266 = vtanh.pop %v262
    %v267 = vtanh.pop %v263
    %v268 = vtanh.pop %v264
    %v269 = vtanh.pop %v265
    %v270 = vmul.f32 %v266, 0.5
    %v271 = vmul.f32 %v267, 0.5
    %v272 = vmul.f32 %v268, 0.5
    %v273 = vmul.f32 %v269, 0.5
    %v274 = vadd.f32 %v270, 0.5
    %v275 = vadd.f32 %v271, 0.5
    %v276 = vadd.f32 %v272, 0.5
    %v277 = vadd.f32 %v273, 0.5
    %279 = vset.pattern.permute.xlu0 0
    %280 = vperm.xlu0 %279, %v34
    %v281 = vpop.permute.xlu0 %280
    %284 = vset.pattern.permute.xlu0 0
    %285 = vperm.xlu0 %284, %v35
    %v286 = vpop.permute.xlu0 %285
    %289 = vset.pattern.permute.xlu0 0
    %290 = vperm.xlu0 %289, %v36
    %v291 = vpop.permute.xlu0 %290
    %294 = vset.pattern.permute.xlu0 0
    %295 = vperm.xlu0 %294, %v37
    %v296 = vpop.permute.xlu0 %295
    %v298 = vmul.f32 %v274, %v281
    %v299 = vmul.f32 %v275, %v286
    %v300 = vmul.f32 %v276, %v291
    %v301 = vmul.f32 %v277, %v296
    %v302 = vsel %vm62, %v298, 0.0
    %v303 = vsel %vm62, %v299, 0.0
    %v304 = vadd.f32 %v302, %v303
    %v305 = vsel %vm62, %v300, 0.0
    %v306 = vadd.f32 %v304, %v305
    %v307 = vsel %vm62, %v301, 0.0
    %v308 = vadd.f32 %v306, %v307
    %v309 = vrot.slane %v308, 4
    %v310 = vadd.f32 %v308, %v309
    %v311 = vrot.slane %v310, 2
    %v312 = vadd.f32 %v310, %v311
    %v313 = vrot.slane %v312, 1
    %v314 = vadd.f32 %v312, %v313
    %s315 = sld [smem:[#allocation2]]
    %v316 = vstv %s315
    %v317 = vadd.f32 %v314, %v316
    %vm318 = vcmask 57344
    %319 = vst.msk [vmem:[#allocation3] sm:$0x1] %vm318, %v317
    // Predicated region
    $region22: #{tpu_custom_call.1} parent=1 // pred_check
      _
    $region23: #{tpu_custom_call.1} parent=1 // pred_check_branch
      %321 = sbr.rel (0) target = $region25
    $region24: #{tpu_custom_call.1} parent=1 // pred_region
      %s323 = ssub.s32 16, 16
      %324 = vsyncadd [#allocation4], %s323
      %s326 = sshll.u32 [#allocation3], 4
      %s327 = int_to_ptr.vmem [resolvable:$true] %s326
      %329 = dma.vmem_to_hbm [thread:$0]  %s327, 16, %s5, [#allocation4]
    $region25: #{tpu_custom_call.1} parent=1 // pred_fallthru
      _
    // Predicated region
    $region26: #{tpu_custom_call.1} parent=1 // pred_check
      _
    $region27: #{tpu_custom_call.1} parent=1 // pred_check_branch
      %331 = sbr.rel (0) target = $region29
    $region28: #{tpu_custom_call.1} parent=1 // pred_region
      %332 = dma.done [#allocation4], 16
    $region29: #{tpu_custom_call.1} parent=1 // pred_fallthru
      _
    %333 = vsyncpa [#allocation4], 1

</llo_original>
